<compile_context>
chip_gen: v7x
topology: tpu7x:2x2x1
jax: 0.10.0
libtpu: 0.0.40
codegen_flags: <defaults>
</compile_context>

<pallas_src>
import jax
import jax.numpy as jnp
from jax.experimental import pallas as pl
from jax.experimental.pallas import tpu as pltpu


def _round_up(x, m):
    return ((x + m - 1) // m) * m


def vae_kernel(x_ref,
               w1_ref, b1_ref,
               w2_ref, b2_ref,
               w3_ref, b3_ref,
               w4_ref, b4_ref,
               out_ref):
    # x / weights are bf16; accumulate in f32 on the MXU, elementwise in f32.
    x = x_ref[...]

    # ----- encoder -----
    h = jnp.dot(x, w1_ref[...], preferred_element_type=jnp.float32) + b1_ref[...]
    h = jnp.maximum(h, 0.0)                                        # ReLU
    z = jnp.dot(h.astype(jnp.bfloat16), w2_ref[...],
                preferred_element_type=jnp.float32) + b2_ref[...]

    # ----- decoder -----
    h2 = jnp.dot(z.astype(jnp.bfloat16), w3_ref[...],
                 preferred_element_type=jnp.float32) + b3_ref[...]
    h2 = jnp.maximum(h2, 0.0)                                      # ReLU
    y = jnp.dot(h2.astype(jnp.bfloat16), w4_ref[...],
                preferred_element_type=jnp.float32) + b4_ref[...]
    out_ref[...] = jax.nn.sigmoid(y).astype(out_ref.dtype)         # Sigmoid


def vae_forward(x_nchw, params, *, tb=None):
    """Runs the fused enc+dec forward. x_nchw: [B, C, H, W] float32."""
    B, C, H, W = x_nchw.shape
    D = C * H * W

    (w1, b1), (w2, b2), (w3, b3), (w4, b4) = params

    # --- pad D to a lane-dense multiple of 128, pad batch to the tile size ---
    D_pad = _round_up(D, 128)
    if tb is None:
        # Aim for >=256 rows per MXU call at realistic batch sizes;
        # shrink (multiple of 16 for bf16 sublane packing) for tiny batches.
        tb = 256 if B >= 256 else _round_up(B, 16)
    B_pad = _round_up(B, tb)

    x2d = x_nchw.reshape(B, D).astype(jnp.float32)
    x2d = jnp.pad(x2d, ((0, B_pad - B), (0, D_pad - D)))

    # Zero-pad the D-facing weight dims so padded x columns contribute nothing;
    # padded output columns/rows are sliced off at the end.
    w1p = jnp.pad(w1, ((0, D_pad - D), (0, 0)))
    w4p = jnp.pad(w4, ((0, 0), (0, D_pad - D)))
    b4p = jnp.pad(b4, ((0, 0), (0, D_pad - D)))

    # bf16 weights / activations for native MXU throughput; biases stay f32.
    x_bf = x2d.astype(jnp.bfloat16)
    w1b, w2b, w3b, w4b = (w.astype(jnp.bfloat16) for w in (w1p, w2, w3, w4p))
    b1f, b2f, b3f, b4f = (b.astype(jnp.float32) for b in (b1, b2, b3, b4p))

    grid = (B_pad // tb,)

    def tile_spec():
        return pl.BlockSpec((tb, D_pad), lambda i: (i, 0))

    def resident_spec(shape):
        # Constant index_map -> fetched once, stays VMEM-resident across steps.
        n = len(shape)
        return pl.BlockSpec(shape, lambda i, _n=n: (0,) * _n)

    # VMEM budget: resident weights/biases + double-buffered x(bf16)/out(f32) tiles.
    weight_bytes = sum(int(a.size) * a.dtype.itemsize
                       for a in (w1b, w2b, w3b, w4b, b1f, b2f, b3f, b4f))
    io_bytes = 2 * tb * D_pad * 2 + 2 * tb * D_pad * 4
    vmem_limit = int(1.5 * (weight_bytes + io_bytes)) + (2 << 20)
    vmem_limit = max(8 << 20, min(vmem_limit, 64 << 20))  # stay inside v7x's 64 MiB

    # NOTE: input_output_aliases would need matching dtypes (x is bf16, out is
    # f32), so it is intentionally not used here.
    out2d = pl.pallas_call(
        vae_kernel,
        out_shape=jax.ShapeDtypeStruct((B_pad, D_pad), jnp.float32),
        grid=grid,
        in_specs=[
            tile_spec(),
            resident_spec(w1b.shape), resident_spec(b1f.shape),
            resident_spec(w2b.shape), resident_spec(b2f.shape),
            resident_spec(w3b.shape), resident_spec(b3f.shape),
            resident_spec(w4b.shape), resident_spec(b4f.shape),
        ],
        out_specs=tile_spec(),
        compiler_params=pltpu.CompilerParams(
            dimension_semantics=("parallel",),   # megacore sharding on v7x; free elsewhere
            vmem_limit_bytes=vmem_limit,
        ),
    )(x_bf, w1b, b1f, w2b, b2f, w3b, b3f, w4b, b4f)

    return out2d[:B, :D].reshape(B, C, H, W)


def init_params(key, in_dim, hidden, latent):
    """Deterministic PyTorch-Linear-style init (uniform(-1/sqrt(fan_in), +))."""
    def linear(k, fan_in, fan_out):
        kw, kb = jax.random.split(k)
        bound = 1.0 / jnp.sqrt(fan_in)
        # Stored as (fan_in, fan_out) so the kernel does x @ W + b.
        w = jax.random.uniform(kw, (fan_in, fan_out), jnp.float32, -bound, bound)
        b = jax.random.uniform(kb, (1, fan_out), jnp.float32, -bound, bound)
        return w, b

    k1, k2, k3, k4 = jax.random.split(key, 4)
    return (
        linear(k1, in_dim, hidden),   # enc fc1
        linear(k2, hidden, latent),   # enc fc2
        linear(k3, latent, hidden),   # dec fc1
        linear(k4, hidden, in_dim),   # dec fc2
    )


def vae_reference(x_nchw, params):
    """Plain-JAX f32 reference (matches PyTorch VAEModel(enc, dec) forward)."""
    B, C, H, W = x_nchw.shape
    x = x_nchw.reshape(B, C * H * W)
    (w1, b1), (w2, b2), (w3, b3), (w4, b4) = params
    h = jnp.maximum(x @ w1 + b1, 0.0)
    z = h @ w2 + b2
    h2 = jnp.maximum(z @ w3 + b3, 0.0)
    y = jax.nn.sigmoid(h2 @ w4 + b4)
    return y.reshape(B, C, H, W)


if __name__ == "__main__":
    key = jax.random.PRNGKey(0)
    kx, kp = jax.random.split(key)

    B, C, H, W = 2, 4, 16, 16          # small NCHW input (D = 1024)
    hidden, latent = 32, 8

    x = jax.random.normal(kx, (B, C, H, W), jnp.float32)
    params = init_params(kp, C * H * W, hidden, latent)

    out = jax.block_until_ready(vae_forward(x, params))
    ref = vae_reference(x, params)

    assert out.shape == (B, C, H, W)
    # bf16 matmul inputs with f32 accumulation -> loosen tolerance vs the f32 reference.
    max_err = float(jnp.max(jnp.abs(out - ref)))
    assert max_err < 3e-2, f"max abs err {max_err}"

    print("KERNEL_OK")
</pallas_src>

<mosaic_0001>
module attributes {stable_mosaic.version = 11 : i64} {
  func.func @vae_kernel(%arg0: i32, %arg1: memref<16x1024xbf16, #tpu.memory_space<vmem>>, %arg2: memref<1024x32xbf16, #tpu.memory_space<vmem>>, %arg3: memref<1x32xf32, #tpu.memory_space<vmem>>, %arg4: memref<32x8xbf16, #tpu.memory_space<vmem>>, %arg5: memref<1x8xf32, #tpu.memory_space<vmem>>, %arg6: memref<8x32xbf16, #tpu.memory_space<vmem>>, %arg7: memref<1x32xf32, #tpu.memory_space<vmem>>, %arg8: memref<32x1024xbf16, #tpu.memory_space<vmem>>, %arg9: memref<1x1024xf32, #tpu.memory_space<vmem>>, %arg10: memref<16x1024xf32, #tpu.memory_space<vmem>>) attributes {dimension_semantics = [#tpu.dimension_semantics<parallel>], iteration_bounds = array<i64: 1>, scalar_prefetch = 0 : i64, scratch_operands = 0 : i64, tpu.core_type = #tpu.core_type<tc>, window_params = [{transform_indices = @transform_0, window_bounds = array<i64: 16, 1024>}, {pipeline_mode = #tpu.pipeline_mode<synchronous>, transform_indices = @transform_1, window_bounds = array<i64: 1024, 32>}, {pipeline_mode = #tpu.pipeline_mode<synchronous>, transform_indices = @transform_2, window_bounds = array<i64: 1, 32>}, {pipeline_mode = #tpu.pipeline_mode<synchronous>, transform_indices = @transform_3, window_bounds = array<i64: 32, 8>}, {pipeline_mode = #tpu.pipeline_mode<synchronous>, transform_indices = @transform_4, window_bounds = array<i64: 1, 8>}, {pipeline_mode = #tpu.pipeline_mode<synchronous>, transform_indices = @transform_5, window_bounds = array<i64: 8, 32>}, {pipeline_mode = #tpu.pipeline_mode<synchronous>, transform_indices = @transform_6, window_bounds = array<i64: 1, 32>}, {pipeline_mode = #tpu.pipeline_mode<synchronous>, transform_indices = @transform_7, window_bounds = array<i64: 32, 1024>}, {pipeline_mode = #tpu.pipeline_mode<synchronous>, transform_indices = @transform_8, window_bounds = array<i64: 1, 1024>}, {transform_indices = @transform_9, window_bounds = array<i64: 16, 1024>}]} {
    %c0 = arith.constant 0 : index
    %c0_0 = arith.constant 0 : index
    %0 = vector.load %arg1[%c0, %c0_0] : memref<16x1024xbf16, #tpu.memory_space<vmem>>, vector<16x1024xbf16>
    %c0_1 = arith.constant 0 : index
    %c0_2 = arith.constant 0 : index
    %1 = vector.load %arg2[%c0_1, %c0_2] : memref<1024x32xbf16, #tpu.memory_space<vmem>>, vector<1024x32xbf16>
    %cst = arith.constant dense<0.000000e+00> : vector<16x32xf32>
    %2 = tpu.matmul %0, %1, %cst {dimension_numbers = #tpu.dot_dimension_numbers<[1], [0], [0], [1], [0, 0, 1, 1], [], []>} : vector<16x1024xbf16>, vector<1024x32xbf16>, vector<16x32xf32> -> vector<16x32xf32>
    %c0_3 = arith.constant 0 : index
    %c0_4 = arith.constant 0 : index
    %3 = vector.load %arg3[%c0_3, %c0_4] : memref<1x32xf32, #tpu.memory_space<vmem>>, vector<1x32xf32>
    %4 = vector.broadcast %3 : vector<1x32xf32> to vector<16x32xf32>
    %5 = arith.addf %2, %4 : vector<16x32xf32>
    %cst_5 = arith.constant 0.000000e+00 : f32
    %6 = vector.broadcast %cst_5 : f32 to vector<16x32xf32>
    %7 = arith.maximumf %5, %6 : vector<16x32xf32>
    %8 = arith.truncf %7 : vector<16x32xf32> to vector<16x32xbf16>
    %c0_6 = arith.constant 0 : index
    %c0_7 = arith.constant 0 : index
    %9 = vector.load %arg4[%c0_6, %c0_7] : memref<32x8xbf16, #tpu.memory_space<vmem>>, vector<32x8xbf16>
    %cst_8 = arith.constant dense<0.000000e+00> : vector<16x8xf32>
    %10 = tpu.matmul %8, %9, %cst_8 {dimension_numbers = #tpu.dot_dimension_numbers<[1], [0], [0], [1], [0, 0, 1, 1], [], []>} : vector<16x32xbf16>, vector<32x8xbf16>, vector<16x8xf32> -> vector<16x8xf32>
    %c0_9 = arith.constant 0 : index
    %c0_10 = arith.constant 0 : index
    %11 = vector.load %arg5[%c0_9, %c0_10] : memref<1x8xf32, #tpu.memory_space<vmem>>, vector<1x8xf32>
    %12 = vector.broadcast %11 : vector<1x8xf32> to vector<16x8xf32>
    %13 = arith.addf %10, %12 : vector<16x8xf32>
    %14 = arith.truncf %13 : vector<16x8xf32> to vector<16x8xbf16>
    %c0_11 = arith.constant 0 : index
    %c0_12 = arith.constant 0 : index
    %15 = vector.load %arg6[%c0_11, %c0_12] : memref<8x32xbf16, #tpu.memory_space<vmem>>, vector<8x32xbf16>
    %cst_13 = arith.constant dense<0.000000e+00> : vector<16x32xf32>
    %16 = tpu.matmul %14, %15, %cst_13 {dimension_numbers = #tpu.dot_dimension_numbers<[1], [0], [0], [1], [0, 0, 1, 1], [], []>} : vector<16x8xbf16>, vector<8x32xbf16>, vector<16x32xf32> -> vector<16x32xf32>
    %c0_14 = arith.constant 0 : index
    %c0_15 = arith.constant 0 : index
    %17 = vector.load %arg7[%c0_14, %c0_15] : memref<1x32xf32, #tpu.memory_space<vmem>>, vector<1x32xf32>
    %18 = vector.broadcast %17 : vector<1x32xf32> to vector<16x32xf32>
    %19 = arith.addf %16, %18 : vector<16x32xf32>
    %cst_16 = arith.constant 0.000000e+00 : f32
    %20 = vector.broadcast %cst_16 : f32 to vector<16x32xf32>
    %21 = arith.maximumf %19, %20 : vector<16x32xf32>
    %22 = arith.truncf %21 : vector<16x32xf32> to vector<16x32xbf16>
    %c0_17 = arith.constant 0 : index
    %c0_18 = arith.constant 0 : index
    %23 = vector.load %arg8[%c0_17, %c0_18] : memref<32x1024xbf16, #tpu.memory_space<vmem>>, vector<32x1024xbf16>
    %cst_19 = arith.constant dense<0.000000e+00> : vector<16x1024xf32>
    %24 = tpu.matmul %22, %23, %cst_19 {dimension_numbers = #tpu.dot_dimension_numbers<[1], [0], [0], [1], [0, 0, 1, 1], [], []>} : vector<16x32xbf16>, vector<32x1024xbf16>, vector<16x1024xf32> -> vector<16x1024xf32>
    %c0_20 = arith.constant 0 : index
    %c0_21 = arith.constant 0 : index
    %25 = vector.load %arg9[%c0_20, %c0_21] : memref<1x1024xf32, #tpu.memory_space<vmem>>, vector<1x1024xf32>
    %26 = vector.broadcast %25 : vector<1x1024xf32> to vector<16x1024xf32>
    %27 = arith.addf %24, %26 : vector<16x1024xf32>
    %28 = arith.negf %27 : vector<16x1024xf32>
    %29 = math.exp %28 : vector<16x1024xf32>
    %cst_22 = arith.constant 1.000000e+00 : f32
    %30 = vector.broadcast %cst_22 : f32 to vector<16x1024xf32>
    %31 = arith.addf %30, %29 : vector<16x1024xf32>
    %32 = arith.divf %30, %31 : vector<16x1024xf32>
    %c0_23 = arith.constant 0 : index
    %c0_24 = arith.constant 0 : index
    %33 = vector.load %arg10[%c0_23, %c0_24] : memref<16x1024xf32, #tpu.memory_space<vmem>>, vector<16x1024xf32>
    tpu.vector_store %arg10[%c0_23, %c0_24], %32 {strides = array<i32>} : memref<16x1024xf32, #tpu.memory_space<vmem>>, vector<16x1024xf32>,
    return
  }
  func.func @transform_0(%arg0: i32) -> (i32, i32) {
    %c0_i32 = arith.constant 0 : i32
    %c0_i32_0 = arith.constant 0 : i32
    return %arg0, %c0_i32 : i32, i32
  }
  func.func @transform_1(%arg0: i32) -> (i32, i32) {
    %c0_i32 = arith.constant 0 : i32
    %c0_i32_0 = arith.constant 0 : i32
    %c0_i32_1 = arith.constant 0 : i32
    return %c0_i32, %c0_i32_0 : i32, i32
  }
  func.func @transform_2(%arg0: i32) -> (i32, i32) {
    %c0_i32 = arith.constant 0 : i32
    %c0_i32_0 = arith.constant 0 : i32
    %c0_i32_1 = arith.constant 0 : i32
    return %c0_i32, %c0_i32_0 : i32, i32
  }
  func.func @transform_3(%arg0: i32) -> (i32, i32) {
    %c0_i32 = arith.constant 0 : i32
    %c0_i32_0 = arith.constant 0 : i32
    %c0_i32_1 = arith.constant 0 : i32
    return %c0_i32, %c0_i32_0 : i32, i32
  }
  func.func @transform_4(%arg0: i32) -> (i32, i32) {
    %c0_i32 = arith.constant 0 : i32
    %c0_i32_0 = arith.constant 0 : i32
    %c0_i32_1 = arith.constant 0 : i32
    return %c0_i32, %c0_i32_0 : i32, i32
  }
  func.func @transform_5(%arg0: i32) -> (i32, i32) {
    %c0_i32 = arith.constant 0 : i32
    %c0_i32_0 = arith.constant 0 : i32
    %c0_i32_1 = arith.constant 0 : i32
    return %c0_i32, %c0_i32_0 : i32, i32
  }
  func.func @transform_6(%arg0: i32) -> (i32, i32) {
    %c0_i32 = arith.constant 0 : i32
    %c0_i32_0 = arith.constant 0 : i32
    %c0_i32_1 = arith.constant 0 : i32
    return %c0_i32, %c0_i32_0 : i32, i32
  }
  func.func @transform_7(%arg0: i32) -> (i32, i32) {
    %c0_i32 = arith.constant 0 : i32
    %c0_i32_0 = arith.constant 0 : i32
    %c0_i32_1 = arith.constant 0 : i32
    return %c0_i32, %c0_i32_0 : i32, i32
  }
  func.func @transform_8(%arg0: i32) -> (i32, i32) {
    %c0_i32 = arith.constant 0 : i32
    %c0_i32_0 = arith.constant 0 : i32
    %c0_i32_1 = arith.constant 0 : i32
    return %c0_i32, %c0_i32_0 : i32, i32
  }
  func.func @transform_9(%arg0: i32) -> (i32, i32) {
    %c0_i32 = arith.constant 0 : i32
    %c0_i32_0 = arith.constant 0 : i32
    return %arg0, %c0_i32 : i32, i32
  }
}

</mosaic_0001>

<llo_original>
// kernel: tpu_custom_call.1
$region0: #{tpu_custom_call.1}
  #allocation0 [shape = 'u32[]', space=smem, size = 0x4, offset = 0x4, fixed_abs, tag = 'smem constant byte address 0x4 - core index']
  #allocation1 [shape = 'u32[144,128]{1,0:T(1,128)}', space=vmem, size = 0x12000, scoped, tag = 'internal scratch']
  %s0 = inlined_call_operand.vmem [shape: bf16[16,1024], index: 0, kind: input, shape index: {}]
  %s1 = inlined_call_operand.vmem [shape: bf16[1024,32], index: 1, kind: input, shape index: {}]
  %s2 = inlined_call_operand.vmem [shape: f32[1,32], index: 2, kind: input, shape index: {}]
  %s3 = inlined_call_operand.vmem [shape: bf16[32,8], index: 3, kind: input, shape index: {}]
  %s4 = inlined_call_operand.vmem [shape: f32[1,8], index: 4, kind: input, shape index: {}]
  %s5 = inlined_call_operand.vmem [shape: bf16[8,32], index: 5, kind: input, shape index: {}]
  %s6 = inlined_call_operand.vmem [shape: f32[1,32], index: 6, kind: input, shape index: {}]
  %s7 = inlined_call_operand.vmem [shape: bf16[32,1024], index: 7, kind: input, shape index: {}]
  %s8 = inlined_call_operand.vmem [shape: f32[1,1024], index: 8, kind: input, shape index: {}]
  %s9 = inlined_call_operand.hbm [shape: f32[16,1024], index: 9, kind: output, shape index: {}]
  %s10 = sld [smem:[#allocation0]]
  $region46: #{tpu_custom_call.1} parent=0
    _
  %s12 = ssub.s32 1, %s10
  %s13 = scalar_select 0, %s12, %s10
  $region1: #{tpu_custom_call.1} parent=0
    #allocation2 [shape = 'u8[65536]{0}', space=vmem, size = 0x10000, scoped, tag = 'output window, operand 0, single buffered']
    #allocation3 [shape = 's32[1]{0}', space=sflag, size = 0x4, scoped, tag = 'scoped memory for tpu_custom_call.1']
    %14 = vsyncpa [#allocation3], 0
    // Predicated region
    $region2: #{tpu_custom_call.1} parent=1 // pred_check
      _
    $region3: #{tpu_custom_call.1} parent=1 // pred_check_branch
      %16 = sbr.rel (0) target = $region5
    $region4: #{tpu_custom_call.1} parent=1 // pred_region
      _
    $region5: #{tpu_custom_call.1} parent=1 // pred_fallthru
      _
    // Predicated region
    $region6: #{tpu_custom_call.1} parent=1 // pred_check
      _
    $region7: #{tpu_custom_call.1} parent=1 // pred_check_branch
      %18 = sbr.rel (0) target = $region9
    $region8: #{tpu_custom_call.1} parent=1 // pred_region
      _
    $region9: #{tpu_custom_call.1} parent=1 // pred_fallthru
      _
    // Predicated region
    $region10: #{tpu_custom_call.1} parent=1 // pred_check
      _
    $region11: #{tpu_custom_call.1} parent=1 // pred_check_branch
      %20 = sbr.rel (0) target = $region13
    $region12: #{tpu_custom_call.1} parent=1 // pred_region
      _
    $region13: #{tpu_custom_call.1} parent=1 // pred_fallthru
      _
    // Predicated region
    $region14: #{tpu_custom_call.1} parent=1 // pred_check
      _
    $region15: #{tpu_custom_call.1} parent=1 // pred_check_branch
      %22 = sbr.rel (0) target = $region17
    $region16: #{tpu_custom_call.1} parent=1 // pred_region
      _
    $region17: #{tpu_custom_call.1} parent=1 // pred_fallthru
      _
    // Predicated region
    $region18: #{tpu_custom_call.1} parent=1 // pred_check
      _
    $region19: #{tpu_custom_call.1} parent=1 // pred_check_branch
      %24 = sbr.rel (0) target = $region21
    $region20: #{tpu_custom_call.1} parent=1 // pred_region
      _
    $region21: #{tpu_custom_call.1} parent=1 // pred_fallthru
      _
    // Predicated region
    $region22: #{tpu_custom_call.1} parent=1 // pred_check
      _
    $region23: #{tpu_custom_call.1} parent=1 // pred_check_branch
      %26 = sbr.rel (0) target = $region25
    $region24: #{tpu_custom_call.1} parent=1 // pred_region
      _
    $region25: #{tpu_custom_call.1} parent=1 // pred_fallthru
      _
    // Predicated region
    $region26: #{tpu_custom_call.1} parent=1 // pred_check
      _
    $region27: #{tpu_custom_call.1} parent=1 // pred_check_branch
      %28 = sbr.rel (0) target = $region29
    $region28: #{tpu_custom_call.1} parent=1 // pred_region
      _
    $region29: #{tpu_custom_call.1} parent=1 // pred_fallthru
      _
    // Predicated region
    $region30: #{tpu_custom_call.1} parent=1 // pred_check
      _
    $region31: #{tpu_custom_call.1} parent=1 // pred_check_branch
      %30 = sbr.rel (0) target = $region33
    $region32: #{tpu_custom_call.1} parent=1 // pred_region
      _
    $region33: #{tpu_custom_call.1} parent=1 // pred_fallthru
      _
    // Predicated region
    $region34: #{tpu_custom_call.1} parent=1 // pred_check
      _
    $region35: #{tpu_custom_call.1} parent=1 // pred_check_branch
      %32 = sbr.rel (0) target = $region37
    $region36: #{tpu_custom_call.1} parent=1 // pred_region
      _
    $region37: #{tpu_custom_call.1} parent=1 // pred_fallthru
      _
    %v34 = vld [vmem:[%s0] sm:$0xff]
    %v35 = vld [vmem:[%s0 + $0x8] sm:$0xff]
    %v36 = vld [vmem:[%s0 + $0x10] sm:$0xff]
    %v37 = vld [vmem:[%s0 + $0x18] sm:$0xff]
    %v38 = vld [vmem:[%s0 + $0x20] sm:$0xff]
    %v39 = vld [vmem:[%s0 + $0x28] sm:$0xff]
    %v40 = vld [vmem:[%s0 + $0x30] sm:$0xff]
    %v41 = vld [vmem:[%s0 + $0x38] sm:$0xff]
    %v42 = vld [vmem:[%s1] sm:$0xf]
    %v43 = vld [vmem:[%s1 + $0x4] sm:$0xf]
    %v44 = vld [vmem:[%s1 + $0x8] sm:$0xf]
    %v45 = vld [vmem:[%s1 + $0xc] sm:$0xf]
    %v46 = vld [vmem:[%s1 + $0x10] sm:$0xf]
    %v47 = vld [vmem:[%s1 + $0x14] sm:$0xf]
    %v48 = vld [vmem:[%s1 + $0x18] sm:$0xf]
    %v49 = vld [vmem:[%s1 + $0x1c] sm:$0xf]
    %v50 = vld [vmem:[%s1 + $0x20] sm:$0xf]
    %v51 = vld [vmem:[%s1 + $0x24] sm:$0xf]
    %v52 = vld [vmem:[%s1 + $0x28] sm:$0xf]
    %v53 = vld [vmem:[%s1 + $0x2c] sm:$0xf]
    %v54 = vld [vmem:[%s1 + $0x30] sm:$0xf]
    %v55 = vld [vmem:[%s1 + $0x34] sm:$0xf]
    %v56 = vld [vmem:[%s1 + $0x38] sm:$0xf]
    %v57 = vld [vmem:[%s1 + $0x3c] sm:$0xf]
    %v58 = vld [vmem:[%s1 + $0x40] sm:$0xf]
    %v59 = vld [vmem:[%s1 + $0x44] sm:$0xf]
    %v60 = vld [vmem:[%s1 + $0x48] sm:$0xf]
    %v61 = vld [vmem:[%s1 + $0x4c] sm:$0xf]
    %v62 = vld [vmem:[%s1 + $0x50] sm:$0xf]
    %v63 = vld [vmem:[%s1 + $0x54] sm:$0xf]
    %v64 = vld [vmem:[%s1 + $0x58] sm:$0xf]
    %v65 = vld [vmem:[%s1 + $0x5c] sm:$0xf]
    %v66 = vld [vmem:[%s1 + $0x60] sm:$0xf]
    %v67 = vld [vmem:[%s1 + $0x64] sm:$0xf]
    %v68 = vld [vmem:[%s1 + $0x68] sm:$0xf]
    %v69 = vld [vmem:[%s1 + $0x6c] sm:$0xf]
    %v70 = vld [vmem:[%s1 + $0x70] sm:$0xf]
    %v71 = vld [vmem:[%s1 + $0x74] sm:$0xf]
    %v72 = vld [vmem:[%s1 + $0x78] sm:$0xf]
    %v73 = vld [vmem:[%s1 + $0x7c] sm:$0xf]
    %v74 = vld [vmem:[%s1 + $0x80] sm:$0xf]
    %v75 = vld [vmem:[%s1 + $0x84] sm:$0xf]
    %v76 = vld [vmem:[%s1 + $0x88] sm:$0xf]
    %v77 = vld [vmem:[%s1 + $0x8c] sm:$0xf]
    %v78 = vld [vmem:[%s1 + $0x90] sm:$0xf]
    %v79 = vld [vmem:[%s1 + $0x94] sm:$0xf]
    %v80 = vld [vmem:[%s1 + $0x98] sm:$0xf]
    %v81 = vld [vmem:[%s1 + $0x9c] sm:$0xf]
    %v82 = vld [vmem:[%s1 + $0xa0] sm:$0xf]
    %v83 = vld [vmem:[%s1 + $0xa4] sm:$0xf]
    %v84 = vld [vmem:[%s1 + $0xa8] sm:$0xf]
    %v85 = vld [vmem:[%s1 + $0xac] sm:$0xf]
    %v86 = vld [vmem:[%s1 + $0xb0] sm:$0xf]
    %v87 = vld [vmem:[%s1 + $0xb4] sm:$0xf]
    %v88 = vld [vmem:[%s1 + $0xb8] sm:$0xf]
    %v89 = vld [vmem:[%s1 + $0xbc] sm:$0xf]
    %v90 = vld [vmem:[%s1 + $0xc0] sm:$0xf]
    %v91 = vld [vmem:[%s1 + $0xc4] sm:$0xf]
    %v92 = vld [vmem:[%s1 + $0xc8] sm:$0xf]
    %v93 = vld [vmem:[%s1 + $0xcc] sm:$0xf]
    %v94 = vld [vmem:[%s1 + $0xd0] sm:$0xf]
    %v95 = vld [vmem:[%s1 + $0xd4] sm:$0xf]
    %v96 = vld [vmem:[%s1 + $0xd8] sm:$0xf]
    %v97 = vld [vmem:[%s1 + $0xdc] sm:$0xf]
    %v98 = vld [vmem:[%s1 + $0xe0] sm:$0xf]
    %v99 = vld [vmem:[%s1 + $0xe4] sm:$0xf]
    %v100 = vld [vmem:[%s1 + $0xe8] sm:$0xf]
    %v101 = vld [vmem:[%s1 + $0xec] sm:$0xf]
    %v102 = vld [vmem:[%s1 + $0xf0] sm:$0xf]
    %v103 = vld [vmem:[%s1 + $0xf4] sm:$0xf]
    %v104 = vld [vmem:[%s1 + $0xf8] sm:$0xf]
    %v105 = vld [vmem:[%s1 + $0xfc] sm:$0xf]
    %v106 = vld [vmem:[%s1 + $0x100] sm:$0xf]
    %v107 = vld [vmem:[%s1 + $0x104] sm:$0xf]
    %v108 = vld [vmem:[%s1 + $0x108] sm:$0xf]
    %v109 = vld [vmem:[%s1 + $0x10c] sm:$0xf]
    %v110 = vld [vmem:[%s1 + $0x110] sm:$0xf]
    %v111 = vld [vmem:[%s1 + $0x114] sm:$0xf]
    %v112 = vld [vmem:[%s1 + $0x118] sm:$0xf]
    %v113 = vld [vmem:[%s1 + $0x11c] sm:$0xf]
    %v114 = vld [vmem:[%s1 + $0x120] sm:$0xf]
    %v115 = vld [vmem:[%s1 + $0x124] sm:$0xf]
    %v116 = vld [vmem:[%s1 + $0x128] sm:$0xf]
    %v117 = vld [vmem:[%s1 + $0x12c] sm:$0xf]
    %v118 = vld [vmem:[%s1 + $0x130] sm:$0xf]
    %v119 = vld [vmem:[%s1 + $0x134] sm:$0xf]
    %v120 = vld [vmem:[%s1 + $0x138] sm:$0xf]
    %v121 = vld [vmem:[%s1 + $0x13c] sm:$0xf]
    %v122 = vld [vmem:[%s1 + $0x140] sm:$0xf]
    %v123 = vld [vmem:[%s1 + $0x144] sm:$0xf]
    %v124 = vld [vmem:[%s1 + $0x148] sm:$0xf]
    %v125 = vld [vmem:[%s1 + $0x14c] sm:$0xf]
    %v126 = vld [vmem:[%s1 + $0x150] sm:$0xf]
    %v127 = vld [vmem:[%s1 + $0x154] sm:$0xf]
    %v128 = vld [vmem:[%s1 + $0x158] sm:$0xf]
    %v129 = vld [vmem:[%s1 + $0x15c] sm:$0xf]
    %v130 = vld [vmem:[%s1 + $0x160] sm:$0xf]
    %v131 = vld [vmem:[%s1 + $0x164] sm:$0xf]
    %v132 = vld [vmem:[%s1 + $0x168] sm:$0xf]
    %v133 = vld [vmem:[%s1 + $0x16c] sm:$0xf]
    %v134 = vld [vmem:[%s1 + $0x170] sm:$0xf]
    %v135 = vld [vmem:[%s1 + $0x174] sm:$0xf]
    %v136 = vld [vmem:[%s1 + $0x178] sm:$0xf]
    %v137 = vld [vmem:[%s1 + $0x17c] sm:$0xf]
    %v138 = vld [vmem:[%s1 + $0x180] sm:$0xf]
    %v139 = vld [vmem:[%s1 + $0x184] sm:$0xf]
    %v140 = vld [vmem:[%s1 + $0x188] sm:$0xf]
    %v141 = vld [vmem:[%s1 + $0x18c] sm:$0xf]
    %v142 = vld [vmem:[%s1 + $0x190] sm:$0xf]
    %v143 = vld [vmem:[%s1 + $0x194] sm:$0xf]
    %v144 = vld [vmem:[%s1 + $0x198] sm:$0xf]
    %v145 = vld [vmem:[%s1 + $0x19c] sm:$0xf]
    %v146 = vld [vmem:[%s1 + $0x1a0] sm:$0xf]
    %v147 = vld [vmem:[%s1 + $0x1a4] sm:$0xf]
    %v148 = vld [vmem:[%s1 + $0x1a8] sm:$0xf]
    %v149 = vld [vmem:[%s1 + $0x1ac] sm:$0xf]
    %v150 = vld [vmem:[%s1 + $0x1b0] sm:$0xf]
    %v151 = vld [vmem:[%s1 + $0x1b4] sm:$0xf]
    %v152 = vld [vmem:[%s1 + $0x1b8] sm:$0xf]
    %v153 = vld [vmem:[%s1 + $0x1bc] sm:$0xf]
    %v154 = vld [vmem:[%s1 + $0x1c0] sm:$0xf]
    %v155 = vld [vmem:[%s1 + $0x1c4] sm:$0xf]
    %v156 = vld [vmem:[%s1 + $0x1c8] sm:$0xf]
    %v157 = vld [vmem:[%s1 + $0x1cc] sm:$0xf]
    %v158 = vld [vmem:[%s1 + $0x1d0] sm:$0xf]
    %v159 = vld [vmem:[%s1 + $0x1d4] sm:$0xf]
    %v160 = vld [vmem:[%s1 + $0x1d8] sm:$0xf]
    %v161 = vld [vmem:[%s1 + $0x1dc] sm:$0xf]
    %v162 = vld [vmem:[%s1 + $0x1e0] sm:$0xf]
    %v163 = vld [vmem:[%s1 + $0x1e4] sm:$0xf]
    %v164 = vld [vmem:[%s1 + $0x1e8] sm:$0xf]
    %v165 = vld [vmem:[%s1 + $0x1ec] sm:$0xf]
    %v166 = vld [vmem:[%s1 + $0x1f0] sm:$0xf]
    %v167 = vld [vmem:[%s1 + $0x1f4] sm:$0xf]
    %v168 = vld [vmem:[%s1 + $0x1f8] sm:$0xf]
    %v169 = vld [vmem:[%s1 + $0x1fc] sm:$0xf]
    %v170 = vld [vmem:[%s2] sm:$0x1]
    %v172 = vlaneseq
    %v173 = vshrl.u32 %v172, 7
    %v174 = vsub.s32 0, %v173
    %v175 = vrot.slane %v170, %v174
    %v185 = vunpack.c.l.b16 %v34
    %v186 = vunpack.c.h.b16 %v34
    %v187 = vunpack.c.l.b16 %v35
    %v188 = vunpack.c.h.b16 %v35
    %v189 = vunpack.c.l.b16 %v36
    %v190 = vunpack.c.h.b16 %v36
    %v191 = vunpack.c.l.b16 %v37
    %v192 = vunpack.c.h.b16 %v37
    %v193 = vunpack.c.l.b16 %v38
    %v194 = vunpack.c.h.b16 %v38
    %v195 = vunpack.c.l.b16 %v39
    %v196 = vunpack.c.h.b16 %v39
    %v197 = vunpack.c.l.b16 %v40
    %v198 = vunpack.c.h.b16 %v40
    %v199 = vunpack.c.l.b16 %v41
    %v200 = vunpack.c.h.b16 %v41
    %v201 = vpack.c.b16 %v193, %v185
    %v202 = vpack.c.b16 %v194, %v186
    %v203 = vpack.c.b16 %v195, %v187
    %v204 = vpack.c.b16 %v196, %v188
    %v205 = vpack.c.b16 %v197, %v189
    %v206 = vpack.c.b16 %v198, %v190
    %v207 = vpack.c.b16 %v199, %v191
    %v208 = vpack.c.b16 %v200, %v192
    %v345 = vunpack.c.l.b16 %v42
    %v346 = vunpack.c.l.b16 %v43
    %v347 = vunpack.c.l.b16 %v44
    %v348 = vunpack.c.l.b16 %v45
    %v349 = vunpack.c.l.b16 %v46
    %v350 = vunpack.c.l.b16 %v47
    %v351 = vunpack.c.l.b16 %v48
    %v352 = vunpack.c.l.b16 %v49
    %v353 = vunpack.c.l.b16 %v50
    %v354 = vunpack.c.l.b16 %v51
    %v355 = vunpack.c.l.b16 %v52
    %v356 = vunpack.c.l.b16 %v53
    %v357 = vunpack.c.l.b16 %v54
    %v358 = vunpack.c.l.b16 %v55
    %v359 = vunpack.c.l.b16 %v56
    %v360 = vunpack.c.l.b16 %v57
    %v361 = vunpack.c.l.b16 %v58
    %v362 = vunpack.c.l.b16 %v59
    %v363 = vunpack.c.l.b16 %v60
    %v364 = vunpack.c.l.b16 %v61
    %v365 = vunpack.c.l.b16 %v62
    %v366 = vunpack.c.l.b16 %v63
    %v367 = vunpack.c.l.b16 %v64
    %v368 = vunpack.c.l.b16 %v65
    %v369 = vunpack.c.l.b16 %v66
    %v370 = vunpack.c.l.b16 %v67
    %v371 = vunpack.c.l.b16 %v68
    %v372 = vunpack.c.l.b16 %v69
    %v373 = vunpack.c.l.b16 %v70
    %v374 = vunpack.c.l.b16 %v71
    %v375 = vunpack.c.l.b16 %v72
    %v376 = vunpack.c.l.b16 %v73
    %v377 = vunpack.c.l.b16 %v74
    %v378 = vunpack.c.l.b16 %v75
    %v379 = vunpack.c.l.b16 %v76
    %v380 = vunpack.c.l.b16 %v77
    %v381 = vunpack.c.l.b16 %v78
    %v382 = vunpack.c.l.b16 %v79
    %v383 = vunpack.c.l.b16 %v80
    %v384 = vunpack.c.l.b16 %v81
    %v385 = vunpack.c.l.b16 %v82
    %v386 = vunpack.c.l.b16 %v83
    %v387 = vunpack.c.l.b16 %v84
    %v388 = vunpack.c.l.b16 %v85
    %v389 = vunpack.c.l.b16 %v86
    %v390 = vunpack.c.l.b16 %v87
    %v391 = vunpack.c.l.b16 %v88
    %v392 = vunpack.c.l.b16 %v89
    %v393 = vunpack.c.l.b16 %v90
    %v394 = vunpack.c.l.b16 %v91
    %v395 = vunpack.c.l.b16 %v92
    %v396 = vunpack.c.l.b16 %v93
    %v397 = vunpack.c.l.b16 %v94
    %v398 = vunpack.c.l.b16 %v95
    %v399 = vunpack.c.l.b16 %v96
    %v400 = vunpack.c.l.b16 %v97
    %v401 = vunpack.c.l.b16 %v98
    %v402 = vunpack.c.l.b16 %v99
    %v403 = vunpack.c.l.b16 %v100
    %v404 = vunpack.c.l.b16 %v101
    %v405 = vunpack.c.l.b16 %v102
    %v406 = vunpack.c.l.b16 %v103
    %v407 = vunpack.c.l.b16 %v104
    %v408 = vunpack.c.l.b16 %v105
    %v409 = vunpack.c.l.b16 %v106
    %v410 = vunpack.c.l.b16 %v107
    %v411 = vunpack.c.l.b16 %v108
    %v412 = vunpack.c.l.b16 %v109
    %v413 = vunpack.c.l.b16 %v110
    %v414 = vunpack.c.l.b16 %v111
    %v415 = vunpack.c.l.b16 %v112
    %v416 = vunpack.c.l.b16 %v113
    %v417 = vunpack.c.l.b16 %v114
    %v418 = vunpack.c.l.b16 %v115
    %v419 = vunpack.c.l.b16 %v116
    %v420 = vunpack.c.l.b16 %v117
    %v421 = vunpack.c.l.b16 %v118
    %v422 = vunpack.c.l.b16 %v119
    %v423 = vunpack.c.l.b16 %v120
    %v424 = vunpack.c.l.b16 %v121
    %v425 = vunpack.c.l.b16 %v122
    %v426 = vunpack.c.l.b16 %v123
    %v427 = vunpack.c.l.b16 %v124
    %v428 = vunpack.c.l.b16 %v125
    %v429 = vunpack.c.l.b16 %v126
    %v430 = vunpack.c.l.b16 %v127
    %v431 = vunpack.c.l.b16 %v128
    %v432 = vunpack.c.l.b16 %v129
    %v433 = vunpack.c.l.b16 %v130
    %v434 = vunpack.c.l.b16 %v131
    %v435 = vunpack.c.l.b16 %v132
    %v436 = vunpack.c.l.b16 %v133
    %v437 = vunpack.c.l.b16 %v134
    %v438 = vunpack.c.l.b16 %v135
    %v439 = vunpack.c.l.b16 %v136
    %v440 = vunpack.c.l.b16 %v137
    %v441 = vunpack.c.l.b16 %v138
    %v442 = vunpack.c.l.b16 %v139
    %v443 = vunpack.c.l.b16 %v140
    %v444 = vunpack.c.l.b16 %v141
    %v445 = vunpack.c.l.b16 %v142
    %v446 = vunpack.c.l.b16 %v143
    %v447 = vunpack.c.l.b16 %v144
    %v448 = vunpack.c.l.b16 %v145
    %v449 = vunpack.c.l.b16 %v146
    %v450 = vunpack.c.l.b16 %v147
    %v451 = vunpack.c.l.b16 %v148
    %v452 = vunpack.c.l.b16 %v149
    %v453 = vunpack.c.l.b16 %v150
    %v454 = vunpack.c.l.b16 %v151
    %v455 = vunpack.c.l.b16 %v152
    %v456 = vunpack.c.l.b16 %v153
    %v457 = vunpack.c.l.b16 %v154
    %v458 = vunpack.c.l.b16 %v155
    %v459 = vunpack.c.l.b16 %v156
    %v460 = vunpack.c.l.b16 %v157
    %v461 = vunpack.c.l.b16 %v158
    %v462 = vunpack.c.l.b16 %v159
    %v463 = vunpack.c.l.b16 %v160
    %v464 = vunpack.c.l.b16 %v161
    %v465 = vunpack.c.l.b16 %v162
    %v466 = vunpack.c.l.b16 %v163
    %v467 = vunpack.c.l.b16 %v164
    %v468 = vunpack.c.l.b16 %v165
    %v469 = vunpack.c.l.b16 %v166
    %v470 = vunpack.c.l.b16 %v167
    %v471 = vunpack.c.l.b16 %v168
    %v472 = vunpack.c.l.b16 %v169
    %v473 = vpack.c.b16 %v346, %v345
    %v474 = vpack.c.b16 %v348, %v347
    %v475 = vpack.c.b16 %v350, %v349
    %v476 = vpack.c.b16 %v352, %v351
    %v477 = vpack.c.b16 %v354, %v353
    %v478 = vpack.c.b16 %v356, %v355
    %v479 = vpack.c.b16 %v358, %v357
    %v480 = vpack.c.b16 %v360, %v359
    %v481 = vpack.c.b16 %v362, %v361
    %v482 = vpack.c.b16 %v364, %v363
    %v483 = vpack.c.b16 %v366, %v365
    %v484 = vpack.c.b16 %v368, %v367
    %v485 = vpack.c.b16 %v370, %v369
    %v486 = vpack.c.b16 %v372, %v371
    %v487 = vpack.c.b16 %v374, %v373
    %v488 = vpack.c.b16 %v376, %v375
    %v489 = vpack.c.b16 %v378, %v377
    %v490 = vpack.c.b16 %v380, %v379
    %v491 = vpack.c.b16 %v382, %v381
    %v492 = vpack.c.b16 %v384, %v383
    %v493 = vpack.c.b16 %v386, %v385
    %v494 = vpack.c.b16 %v388, %v387
    %v495 = vpack.c.b16 %v390, %v389
    %v496 = vpack.c.b16 %v392, %v391
    %v497 = vpack.c.b16 %v394, %v393
    %v498 = vpack.c.b16 %v396, %v395
    %v499 = vpack.c.b16 %v398, %v397
    %v500 = vpack.c.b16 %v400, %v399
    %v501 = vpack.c.b16 %v402, %v401
    %v502 = vpack.c.b16 %v404, %v403
    %v503 = vpack.c.b16 %v406, %v405
    %v504 = vpack.c.b16 %v408, %v407
    %v505 = vpack.c.b16 %v410, %v409
    %v506 = vpack.c.b16 %v412, %v411
    %v507 = vpack.c.b16 %v414, %v413
    %v508 = vpack.c.b16 %v416, %v415
    %v509 = vpack.c.b16 %v418, %v417
    %v510 = vpack.c.b16 %v420, %v419
    %v511 = vpack.c.b16 %v422, %v421
    %v512 = vpack.c.b16 %v424, %v423
    %v513 = vpack.c.b16 %v426, %v425
    %v514 = vpack.c.b16 %v428, %v427
    %v515 = vpack.c.b16 %v430, %v429
    %v516 = vpack.c.b16 %v432, %v431
    %v517 = vpack.c.b16 %v434, %v433
    %v518 = vpack.c.b16 %v436, %v435
    %v519 = vpack.c.b16 %v438, %v437
    %v520 = vpack.c.b16 %v440, %v439
    %v521 = vpack.c.b16 %v442, %v441
    %v522 = vpack.c.b16 %v444, %v443
    %v523 = vpack.c.b16 %v446, %v445
    %v524 = vpack.c.b16 %v448, %v447
    %v525 = vpack.c.b16 %v450, %v449
    %v526 = vpack.c.b16 %v452, %v451
    %v527 = vpack.c.b16 %v454, %v453
    %v528 = vpack.c.b16 %v456, %v455
    %v529 = vpack.c.b16 %v458, %v457
    %v530 = vpack.c.b16 %v460, %v459
    %v531 = vpack.c.b16 %v462, %v461
    %v532 = vpack.c.b16 %v464, %v463
    %v533 = vpack.c.b16 %v466, %v465
    %v534 = vpack.c.b16 %v468, %v467
    %v535 = vpack.c.b16 %v470, %v469
    %v536 = vpack.c.b16 %v472, %v471
    %601 = vmatprep.subr.bf16.mxu0 0
    %602 = vmatpush1.bf16.msra.mxu0 %v473
    %603 = vmatprep.subr.bf16.mxu0 0
    %604 = vmatpush1.bf16.msra.mxu0 %v474
    %605 = vmatprep.subr.bf16.mxu0 0
    %606 = vmatpush1.bf16.msra.mxu0 %v475
    %607 = vmatprep.subr.bf16.mxu0 0
    %608 = vmatpush1.bf16.msra.mxu0 %v476
    %609 = vmatprep.subr.bf16.mxu0 0
    %610 = vmatpush1.bf16.msra.mxu0 %v477
    %611 = vmatprep.subr.bf16.mxu0 0
    %612 = vmatpush1.bf16.msra.mxu0 %v478
    %613 = vmatprep.subr.bf16.mxu0 0
    %614 = vmatpush1.bf16.msra.mxu0 %v479
    %615 = vmatprep.subr.bf16.mxu0 0
    %616 = vmatpush1.bf16.msra.mxu0 %v480
    %617 = vmatprep.subr.bf16.mxu0 0
    %618 = vmatpush1.bf16.msra.mxu0 %v481
    %619 = vmatprep.subr.bf16.mxu0 0
    %620 = vmatpush1.bf16.msra.mxu0 %v482
    %621 = vmatprep.subr.bf16.mxu0 0
    %622 = vmatpush1.bf16.msra.mxu0 %v483
    %623 = vmatprep.subr.bf16.mxu0 0
    %624 = vmatpush1.bf16.msra.mxu0 %v484
    %625 = vmatprep.subr.bf16.mxu0 0
    %626 = vmatpush1.bf16.msra.mxu0 %v485
    %627 = vmatprep.subr.bf16.mxu0 0
    %628 = vmatpush1.bf16.msra.mxu0 %v486
    %629 = vmatprep.subr.bf16.mxu0 0
    %630 = vmatpush1.bf16.msra.mxu0 %v487
    %631 = vmatprep.subr.bf16.mxu0 0
    %632 = vmatpush1.bf16.msra.mxu0 %v488
    %633 = vmatprep.mubr.bf16.mxu0 %v202
    %634 = vmatmul.mubr.bf16.gmra.mrb[0].mxu0 %v201
    %v635 = vpop.f32.mrb[0].mxu0
    %v636 = vadd.f32 %v175, %v635
    %v637 = vpop.f32.mrb[0].mxu0
    %v638 = vpop.f32.mrb[0].mxu0
    %v639 = vadd.f32 %v175, %v638
    %v640 = vpop.f32.mrb[0].mxu0
    %641 = vdwg.mxu0
    %642 = vmatprep.subr.bf16.mxu0 0
    %643 = vmatpush1.bf16.msra.mxu0 %v489
    %644 = vmatprep.subr.bf16.mxu0 0
    %645 = vmatpush1.bf16.msra.mxu0 %v490
    %646 = vmatprep.subr.bf16.mxu0 0
    %647 = vmatpush1.bf16.msra.mxu0 %v491
    %648 = vmatprep.subr.bf16.mxu0 0
    %649 = vmatpush1.bf16.msra.mxu0 %v492
    %650 = vmatprep.subr.bf16.mxu0 0
    %651 = vmatpush1.bf16.msra.mxu0 %v493
    %652 = vmatprep.subr.bf16.mxu0 0
    %653 = vmatpush1.bf16.msra.mxu0 %v494
    %654 = vmatprep.subr.bf16.mxu0 0
    %655 = vmatpush1.bf16.msra.mxu0 %v495
    %656 = vmatprep.subr.bf16.mxu0 0
    %657 = vmatpush1.bf16.msra.mxu0 %v496
    %658 = vmatprep.subr.bf16.mxu0 0
    %659 = vmatpush1.bf16.msra.mxu0 %v497
    %660 = vmatprep.subr.bf16.mxu0 0
    %661 = vmatpush1.bf16.msra.mxu0 %v498
    %662 = vmatprep.subr.bf16.mxu0 0
    %663 = vmatpush1.bf16.msra.mxu0 %v499
    %664 = vmatprep.subr.bf16.mxu0 0
    %665 = vmatpush1.bf16.msra.mxu0 %v500
    %666 = vmatprep.subr.bf16.mxu0 0
    %667 = vmatpush1.bf16.msra.mxu0 %v501
    %668 = vmatprep.subr.bf16.mxu0 0
    %669 = vmatpush1.bf16.msra.mxu0 %v502
    %670 = vmatprep.subr.bf16.mxu0 0
    %671 = vmatpush1.bf16.msra.mxu0 %v503
    %672 = vmatprep.subr.bf16.mxu0 0
    %673 = vmatpush1.bf16.msra.mxu0 %v504
    %674 = vmatprep.mubr.bf16.mxu0 %v204
    %675 = vmatmul.mubr.bf16.gmra.mrb[0].mxu0 %v203
    %v676 = vpop.f32.mrb[0].mxu0
    %v677 = vadd.f32 %v636, %v676
    %v678 = vpop.f32.mrb[0].mxu0
    %v679 = vpop.f32.mrb[0].mxu0
    %v680 = vadd.f32 %v639, %v679
    %v681 = vpop.f32.mrb[0].mxu0
    %682 = vdwg.mxu0
    %683 = vmatprep.subr.bf16.mxu0 0
    %684 = vmatpush1.bf16.msra.mxu0 %v505
    %685 = vmatprep.subr.bf16.mxu0 0
    %686 = vmatpush1.bf16.msra.mxu0 %v506
    %687 = vmatprep.subr.bf16.mxu0 0
    %688 = vmatpush1.bf16.msra.mxu0 %v507
    %689 = vmatprep.subr.bf16.mxu0 0
    %690 = vmatpush1.bf16.msra.mxu0 %v508
    %691 = vmatprep.subr.bf16.mxu0 0
    %692 = vmatpush1.bf16.msra.mxu0 %v509
    %693 = vmatprep.subr.bf16.mxu0 0
    %694 = vmatpush1.bf16.msra.mxu0 %v510
    %695 = vmatprep.subr.bf16.mxu0 0
    %696 = vmatpush1.bf16.msra.mxu0 %v511
    %697 = vmatprep.subr.bf16.mxu0 0
    %698 = vmatpush1.bf16.msra.mxu0 %v512
    %699 = vmatprep.subr.bf16.mxu0 0
    %700 = vmatpush1.bf16.msra.mxu0 %v513
    %701 = vmatprep.subr.bf16.mxu0 0
    %702 = vmatpush1.bf16.msra.mxu0 %v514
    %703 = vmatprep.subr.bf16.mxu0 0
    %704 = vmatpush1.bf16.msra.mxu0 %v515
    %705 = vmatprep.subr.bf16.mxu0 0
    %706 = vmatpush1.bf16.msra.mxu0 %v516
    %707 = vmatprep.subr.bf16.mxu0 0
    %708 = vmatpush1.bf16.msra.mxu0 %v517
    %709 = vmatprep.subr.bf16.mxu0 0
    %710 = vmatpush1.bf16.msra.mxu0 %v518
    %711 = vmatprep.subr.bf16.mxu0 0
    %712 = vmatpush1.bf16.msra.mxu0 %v519
    %713 = vmatprep.subr.bf16.mxu0 0
    %714 = vmatpush1.bf16.msra.mxu0 %v520
    %715 = vmatprep.mubr.bf16.mxu0 %v206
    %716 = vmatmul.mubr.bf16.gmra.mrb[0].mxu0 %v205
    %v717 = vpop.f32.mrb[0].mxu0
    %v718 = vadd.f32 %v677, %v717
    %v719 = vpop.f32.mrb[0].mxu0
    %v720 = vpop.f32.mrb[0].mxu0
    %v721 = vadd.f32 %v680, %v720
    %v722 = vpop.f32.mrb[0].mxu0
    %723 = vdwg.mxu0
    %724 = vmatprep.subr.bf16.mxu0 0
    %725 = vmatpush1.bf16.msra.mxu0 %v521
    %726 = vmatprep.subr.bf16.mxu0 0
    %727 = vmatpush1.bf16.msra.mxu0 %v522
    %728 = vmatprep.subr.bf16.mxu0 0
    %729 = vmatpush1.bf16.msra.mxu0 %v523
    %730 = vmatprep.subr.bf16.mxu0 0
    %731 = vmatpush1.bf16.msra.mxu0 %v524
    %732 = vmatprep.subr.bf16.mxu0 0
    %733 = vmatpush1.bf16.msra.mxu0 %v525
    %734 = vmatprep.subr.bf16.mxu0 0
    %735 = vmatpush1.bf16.msra.mxu0 %v526
    %736 = vmatprep.subr.bf16.mxu0 0
    %737 = vmatpush1.bf16.msra.mxu0 %v527
    %738 = vmatprep.subr.bf16.mxu0 0
    %739 = vmatpush1.bf16.msra.mxu0 %v528
    %740 = vmatprep.subr.bf16.mxu0 0
    %741 = vmatpush1.bf16.msra.mxu0 %v529
    %742 = vmatprep.subr.bf16.mxu0 0
    %743 = vmatpush1.bf16.msra.mxu0 %v530
    %744 = vmatprep.subr.bf16.mxu0 0
    %745 = vmatpush1.bf16.msra.mxu0 %v531
    %746 = vmatprep.subr.bf16.mxu0 0
    %747 = vmatpush1.bf16.msra.mxu0 %v532
    %748 = vmatprep.subr.bf16.mxu0 0
    %749 = vmatpush1.bf16.msra.mxu0 %v533
    %750 = vmatprep.subr.bf16.mxu0 0
    %751 = vmatpush1.bf16.msra.mxu0 %v534
    %752 = vmatprep.subr.bf16.mxu0 0
    %753 = vmatpush1.bf16.msra.mxu0 %v535
    %754 = vmatprep.subr.bf16.mxu0 0
    %755 = vmatpush1.bf16.msra.mxu0 %v536
    %756 = vmatprep.mubr.bf16.mxu0 %v208
    %757 = vmatmul.mubr.bf16.gmra.mrb[0].mxu0 %v207
    %v758 = vpop.f32.mrb[0].mxu0
    %v759 = vadd.f32 %v718, %v758
    %v760 = vpop.f32.mrb[0].mxu0
    %v761 = vpop.f32.mrb[0].mxu0
    %v762 = vadd.f32 %v721, %v761
    %v763 = vpop.f32.mrb[0].mxu0
    %764 = vdwg.mxu0
    %v765 = vmax.f32 %v759, 0.0
    %v766 = vmax.f32 %v762, 0.0
    %v767 = vpack.c.bf16 %v766, %v765
    %v768 = vld [vmem:[%s3] sm:$0xf]
    %v769 = vld [vmem:[%s3 + $0x4] sm:$0xf]
    %v770 = vld [vmem:[%s3 + $0x8] sm:$0xf]
    %v771 = vld [vmem:[%s3 + $0xc] sm:$0xf]
    %v772 = vld [vmem:[%s4] sm:$0x1]
    %v774 = vlaneseq
    %v775 = vshrl.u32 %v774, 7
    %v776 = vsub.s32 0, %v775
    %v777 = vrot.slane %v772, %v776
    %v783 = vunpack.c.l.b16 %v768
    %v784 = vunpack.c.l.b16 %v769
    %v785 = vunpack.c.l.b16 %v770
    %v786 = vunpack.c.l.b16 %v771
    %v787 = vpack.c.b16 %v784, %v783
    %v788 = vpack.c.b16 %v786, %v785
    %vm791 = vcmask 261120
    %v793 = vsel %vm791, %v767, 0
    %795 = vmatprep.subr.bf16.mxu0 0
    %796 = vmatpush1.bf16.msra.mxu0 %v787
    %797 = vmatprep.subr.bf16.mxu0 0
    %798 = vmatpush1.bf16.msra.mxu0 %v788
    %799 = vmatprep.subr.bf16.mxu0 0
    %800 = vmatpush1.bf16.msra.mxu0 0
    %801 = vmatprep.subr.bf16.mxu0 0
    %802 = vmatpush1.bf16.msra.mxu0 0
    %803 = vmatprep.subr.bf16.mxu0 0
    %804 = vmatpush1.bf16.msra.mxu0 0
    %805 = vmatprep.subr.bf16.mxu0 0
    %806 = vmatpush1.bf16.msra.mxu0 0
    %807 = vmatprep.subr.bf16.mxu0 0
    %808 = vmatpush1.bf16.msra.mxu0 0
    %809 = vmatprep.subr.bf16.mxu0 0
    %810 = vmatpush1.bf16.msra.mxu0 0
    %811 = vmatprep.subr.bf16.mxu0 0
    %812 = vmatpush1.bf16.msra.mxu0 0
    %813 = vmatprep.subr.bf16.mxu0 0
    %814 = vmatpush1.bf16.msra.mxu0 0
    %815 = vmatprep.subr.bf16.mxu0 0
    %816 = vmatpush1.bf16.msra.mxu0 0
    %817 = vmatprep.subr.bf16.mxu0 0
    %818 = vmatpush1.bf16.msra.mxu0 0
    %819 = vmatprep.subr.bf16.mxu0 0
    %820 = vmatpush1.bf16.msra.mxu0 0
    %821 = vmatprep.subr.bf16.mxu0 0
    %822 = vmatpush1.bf16.msra.mxu0 0
    %823 = vmatprep.subr.bf16.mxu0 0
    %824 = vmatpush1.bf16.msra.mxu0 0
    %825 = vmatprep.subr.bf16.mxu0 0
    %826 = vmatpush1.bf16.msra.mxu0 0
    %827 = vmatprep.mubr.bf16.mxu0 0
    %828 = vmatmul.mubr.bf16.gmra.mrb[0].mxu0 %v793
    %v829 = vpop.f32.mrb[0].mxu0
    %v830 = vadd.f32 %v777, %v829
    %v831 = vpop.f32.mrb[0].mxu0
    %v832 = vpop.f32.mrb[0].mxu0
    %v833 = vadd.f32 %v777, %v832
    %v834 = vpop.f32.mrb[0].mxu0
    %835 = vdwg.mxu0
    %v836 = vpack.c.bf16 %v833, %v830
    %v837 = vld [vmem:[%s5] sm:$0xf]
    %v838 = vld [vmem:[%s6] sm:$0x1]
    %v840 = vlaneseq
    %v841 = vshrl.u32 %v840, 7
    %v842 = vsub.s32 0, %v841
    %v843 = vrot.slane %v838, %v842
    %vm845 = vcmask 64512
    %v847 = vsel %vm845, %v836, 0
    %vm849 = vcmask 1043456
    %v851 = vsel %vm849, %v837, 0
    %853 = vmatprep.subr.bf16.mxu0 0
    %854 = vmatpush1.bf16.msra.mxu0 %v851
    %855 = vmatprep.subr.bf16.mxu0 0
    %856 = vmatpush1.bf16.msra.mxu0 0
    %857 = vmatprep.subr.bf16.mxu0 0
    %858 = vmatpush1.bf16.msra.mxu0 0
    %859 = vmatprep.subr.bf16.mxu0 0
    %860 = vmatpush1.bf16.msra.mxu0 0
    %861 = vmatprep.subr.bf16.mxu0 0
    %862 = vmatpush1.bf16.msra.mxu0 0
    %863 = vmatprep.subr.bf16.mxu0 0
    %864 = vmatpush1.bf16.msra.mxu0 0
    %865 = vmatprep.subr.bf16.mxu0 0
    %866 = vmatpush1.bf16.msra.mxu0 0
    %867 = vmatprep.subr.bf16.mxu0 0
    %868 = vmatpush1.bf16.msra.mxu0 0
    %869 = vmatprep.subr.bf16.mxu0 0
    %870 = vmatpush1.bf16.msra.mxu0 0
    %871 = vmatprep.subr.bf16.mxu0 0
    %872 = vmatpush1.bf16.msra.mxu0 0
    %873 = vmatprep.subr.bf16.mxu0 0
    %874 = vmatpush1.bf16.msra.mxu0 0
    %875 = vmatprep.subr.bf16.mxu0 0
    %876 = vmatpush1.bf16.msra.mxu0 0
    %877 = vmatprep.subr.bf16.mxu0 0
    %878 = vmatpush1.bf16.msra.mxu0 0
    %879 = vmatprep.subr.bf16.mxu0 0
    %880 = vmatpush1.bf16.msra.mxu0 0
    %881 = vmatprep.subr.bf16.mxu0 0
    %882 = vmatpush1.bf16.msra.mxu0 0
    %883 = vmatprep.subr.bf16.mxu0 0
    %884 = vmatpush1.bf16.msra.mxu0 0
    %885 = vmatprep.mubr.bf16.mxu0 0
    %886 = vmatmul.mubr.bf16.gmra.mrb[0].mxu0 %v847
    %v887 = vpop.f32.mrb[0].mxu0
    %v888 = vadd.f32 %v843, %v887
    %v889 = vpop.f32.mrb[0].mxu0
    %v890 = vpop.f32.mrb[0].mxu0
    %v891 = vadd.f32 %v843, %v890
    %v892 = vpop.f32.mrb[0].mxu0
    %893 = vdwg.mxu0
    %v894 = vmax.f32 %v888, 0.0
    %v895 = vmax.f32 %v891, 0.0
    %v896 = vpack.c.bf16 %v895, %v894
    %v897 = vld [vmem:[%s7] sm:$0xff]
    %v898 = vld [vmem:[%s7 + $0x8] sm:$0xff]
    %v899 = vld [vmem:[%s7 + $0x10] sm:$0xff]
    %v900 = vld [vmem:[%s7 + $0x18] sm:$0xff]
    %v901 = vld [vmem:[%s7 + $0x20] sm:$0xff]
    %v902 = vld [vmem:[%s7 + $0x28] sm:$0xff]
    %v903 = vld [vmem:[%s7 + $0x30] sm:$0xff]
    %v904 = vld [vmem:[%s7 + $0x38] sm:$0xff]
    %v905 = vld [vmem:[%s7 + $0x40] sm:$0xff]
    %v906 = vld [vmem:[%s7 + $0x48] sm:$0xff]
    %v907 = vld [vmem:[%s7 + $0x50] sm:$0xff]
    %v908 = vld [vmem:[%s7 + $0x58] sm:$0xff]
    %v909 = vld [vmem:[%s7 + $0x60] sm:$0xff]
    %v910 = vld [vmem:[%s7 + $0x68] sm:$0xff]
    %v911 = vld [vmem:[%s7 + $0x70] sm:$0xff]
    %v912 = vld [vmem:[%s7 + $0x78] sm:$0xff]
    %v913 = vld [vmem:[%s8] sm:$0xff]
    %v915 = vlaneseq
    %v916 = vshrl.u32 %v915, 7
    %v917 = vsub.s32 0, %v916
    %v918 = vrot.slane %v913, %v917
    %v919 = vlaneseq
    %v920 = vshrl.u32 %v919, 7
    %v921 = vsub.s32 1, %v920
    %v922 = vrot.slane %v913, %v921
    %v923 = vlaneseq
    %v924 = vshrl.u32 %v923, 7
    %v925 = vsub.s32 2, %v924
    %v926 = vrot.slane %v913, %v925
    %v927 = vlaneseq
    %v928 = vshrl.u32 %v927, 7
    %v929 = vsub.s32 3, %v928
    %v930 = vrot.slane %v913, %v929
    %v931 = vlaneseq
    %v932 = vshrl.u32 %v931, 7
    %v933 = vsub.s32 4, %v932
    %v934 = vrot.slane %v913, %v933
    %v935 = vlaneseq
    %v936 = vshrl.u32 %v935, 7
    %v937 = vsub.s32 5, %v936
    %v938 = vrot.slane %v913, %v937
    %v939 = vlaneseq
    %v940 = vshrl.u32 %v939, 7
    %v941 = vsub.s32 6, %v940
    %v942 = vrot.slane %v913, %v941
    %v943 = vlaneseq
    %v944 = vshrl.u32 %v943, 7
    %v945 = vsub.s32 7, %v944
    %v946 = vrot.slane %v913, %v945
    %v971 = vunpack.c.l.b16 %v897
    %v972 = vunpack.c.h.b16 %v897
    %v973 = vunpack.c.l.b16 %v898
    %v974 = vunpack.c.h.b16 %v898
    %v975 = vunpack.c.l.b16 %v899
    %v976 = vunpack.c.h.b16 %v899
    %v977 = vunpack.c.l.b16 %v900
    %v978 = vunpack.c.h.b16 %v900
    %v979 = vunpack.c.l.b16 %v901
    %v980 = vunpack.c.h.b16 %v901
    %v981 = vunpack.c.l.b16 %v902
    %v982 = vunpack.c.h.b16 %v902
    %v983 = vunpack.c.l.b16 %v903
    %v984 = vunpack.c.h.b16 %v903
    %v985 = vunpack.c.l.b16 %v904
    %v986 = vunpack.c.h.b16 %v904
    %v987 = vunpack.c.l.b16 %v905
    %v988 = vunpack.c.h.b16 %v905
    %v989 = vunpack.c.l.b16 %v906
    %v990 = vunpack.c.h.b16 %v906
    %v991 = vunpack.c.l.b16 %v907
    %v992 = vunpack.c.h.b16 %v907
    %v993 = vunpack.c.l.b16 %v908
    %v994 = vunpack.c.h.b16 %v908
    %v995 = vunpack.c.l.b16 %v909
    %v996 = vunpack.c.h.b16 %v909
    %v997 = vunpack.c.l.b16 %v910
    %v998 = vunpack.c.h.b16 %v910
    %v999 = vunpack.c.l.b16 %v911
    %v1000 = vunpack.c.h.b16 %v911
    %v1001 = vunpack.c.l.b16 %v912
    %v1002 = vunpack.c.h.b16 %v912
    %v1003 = vpack.c.b16 %v979, %v971
    %v1004 = vpack.c.b16 %v980, %v972
    %v1005 = vpack.c.b16 %v981, %v973
    %v1006 = vpack.c.b16 %v982, %v974
    %v1007 = vpack.c.b16 %v983, %v975
    %v1008 = vpack.c.b16 %v984, %v976
    %v1009 = vpack.c.b16 %v985, %v977
    %v1010 = vpack.c.b16 %v986, %v978
    %v1011 = vpack.c.b16 %v995, %v987
    %v1012 = vpack.c.b16 %v996, %v988
    %v1013 = vpack.c.b16 %v997, %v989
    %v1014 = vpack.c.b16 %v998, %v990
    %v1015 = vpack.c.b16 %v999, %v991
    %v1016 = vpack.c.b16 %v1000, %v992
    %v1017 = vpack.c.b16 %v1001, %v993
    %v1018 = vpack.c.b16 %v1002, %v994
    %v1036 = vsel %vm791, %v896, 0
    %1038 = vmatprep.subr.bf16.mxu0 %v1004
    %1039 = vmatpush1.bf16.msra.mxu0 %v1003
    %1040 = vmatprep.subr.bf16.mxu0 %v1012
    %1041 = vmatpush1.bf16.msra.mxu0 %v1011
    %1042 = vmatprep.subr.bf16.mxu0 0
    %1043 = vmatpush1.bf16.msra.mxu0 0
    %1044 = vmatprep.subr.bf16.mxu0 0
    %1045 = vmatpush1.bf16.msra.mxu0 0
    %1046 = vmatprep.subr.bf16.mxu0 0
    %1047 = vmatpush1.bf16.msra.mxu0 0
    %1048 = vmatprep.subr.bf16.mxu0 0
    %1049 = vmatpush1.bf16.msra.mxu0 0
    %1050 = vmatprep.subr.bf16.mxu0 0
    %1051 = vmatpush1.bf16.msra.mxu0 0
    %1052 = vmatprep.subr.bf16.mxu0 0
    %1053 = vmatpush1.bf16.msra.mxu0 0
    %1054 = vmatprep.subr.bf16.mxu0 0
    %1055 = vmatpush1.bf16.msra.mxu0 0
    %1056 = vmatprep.subr.bf16.mxu0 0
    %1057 = vmatpush1.bf16.msra.mxu0 0
    %1058 = vmatprep.subr.bf16.mxu0 0
    %1059 = vmatpush1.bf16.msra.mxu0 0
    %1060 = vmatprep.subr.bf16.mxu0 0
    %1061 = vmatpush1.bf16.msra.mxu0 0
    %1062 = vmatprep.subr.bf16.mxu0 0
    %1063 = vmatpush1.bf16.msra.mxu0 0
    %1064 = vmatprep.subr.bf16.mxu0 0
    %1065 = vmatpush1.bf16.msra.mxu0 0
    %1066 = vmatprep.subr.bf16.mxu0 0
    %1067 = vmatpush1.bf16.msra.mxu0 0
    %1068 = vmatprep.subr.bf16.mxu0 0
    %1069 = vmatpush1.bf16.msra.mxu0 0
    %1070 = vmatprep.mubr.bf16.mxu0 0
    %1071 = vmatmul.mubr.bf16.gmra.mrb[0].mxu0 %v1036
    %v1072 = vpop.f32.mrb[0].mxu0
    %v1073 = vadd.f32 %v918, %v1072
    %v1074 = vpop.f32.mrb[0].mxu0
    %v1075 = vadd.f32 %v922, %v1074
    %v1076 = vpop.f32.mrb[0].mxu0
    %v1077 = vadd.f32 %v918, %v1076
    %v1078 = vpop.f32.mrb[0].mxu0
    %v1079 = vadd.f32 %v922, %v1078
    %1080 = vdwg.mxu0
    %1081 = vmatprep.subr.bf16.mxu0 %v1006
    %1082 = vmatpush1.bf16.msra.mxu0 %v1005
    %1083 = vmatprep.subr.bf16.mxu0 %v1014
    %1084 = vmatpush1.bf16.msra.mxu0 %v1013
    %1085 = vmatprep.subr.bf16.mxu0 0
    %1086 = vmatpush1.bf16.msra.mxu0 0
    %1087 = vmatprep.subr.bf16.mxu0 0
    %1088 = vmatpush1.bf16.msra.mxu0 0
    %1089 = vmatprep.subr.bf16.mxu0 0
    %1090 = vmatpush1.bf16.msra.mxu0 0
    %1091 = vmatprep.subr.bf16.mxu0 0
    %1092 = vmatpush1.bf16.msra.mxu0 0
    %1093 = vmatprep.subr.bf16.mxu0 0
    %1094 = vmatpush1.bf16.msra.mxu0 0
    %1095 = vmatprep.subr.bf16.mxu0 0
    %1096 = vmatpush1.bf16.msra.mxu0 0
    %1097 = vmatprep.subr.bf16.mxu0 0
    %1098 = vmatpush1.bf16.msra.mxu0 0
    %1099 = vmatprep.subr.bf16.mxu0 0
    %1100 = vmatpush1.bf16.msra.mxu0 0
    %1101 = vmatprep.subr.bf16.mxu0 0
    %1102 = vmatpush1.bf16.msra.mxu0 0
    %1103 = vmatprep.subr.bf16.mxu0 0
    %1104 = vmatpush1.bf16.msra.mxu0 0
    %1105 = vmatprep.subr.bf16.mxu0 0
    %1106 = vmatpush1.bf16.msra.mxu0 0
    %1107 = vmatprep.subr.bf16.mxu0 0
    %1108 = vmatpush1.bf16.msra.mxu0 0
    %1109 = vmatprep.subr.bf16.mxu0 0
    %1110 = vmatpush1.bf16.msra.mxu0 0
    %1111 = vmatprep.subr.bf16.mxu0 0
    %1112 = vmatpush1.bf16.msra.mxu0 0
    %1113 = vmatprep.mubr.bf16.mxu0 0
    %1114 = vmatmul.mubr.bf16.gmra.mrb[0].mxu0 %v1036
    %v1115 = vpop.f32.mrb[0].mxu0
    %v1116 = vadd.f32 %v926, %v1115
    %v1117 = vpop.f32.mrb[0].mxu0
    %v1118 = vadd.f32 %v930, %v1117
    %v1119 = vpop.f32.mrb[0].mxu0
    %v1120 = vadd.f32 %v926, %v1119
    %v1121 = vpop.f32.mrb[0].mxu0
    %v1122 = vadd.f32 %v930, %v1121
    %1123 = vdwg.mxu0
    %1124 = vmatprep.subr.bf16.mxu0 %v1008
    %1125 = vmatpush1.bf16.msra.mxu0 %v1007
    %1126 = vmatprep.subr.bf16.mxu0 %v1016
    %1127 = vmatpush1.bf16.msra.mxu0 %v1015
    %1128 = vmatprep.subr.bf16.mxu0 0
    %1129 = vmatpush1.bf16.msra.mxu0 0
    %1130 = vmatprep.subr.bf16.mxu0 0
    %1131 = vmatpush1.bf16.msra.mxu0 0
    %1132 = vmatprep.subr.bf16.mxu0 0
    %1133 = vmatpush1.bf16.msra.mxu0 0
    %1134 = vmatprep.subr.bf16.mxu0 0
    %1135 = vmatpush1.bf16.msra.mxu0 0
    %1136 = vmatprep.subr.bf16.mxu0 0
    %1137 = vmatpush1.bf16.msra.mxu0 0
    %1138 = vmatprep.subr.bf16.mxu0 0
    %1139 = vmatpush1.bf16.msra.mxu0 0
    %1140 = vmatprep.subr.bf16.mxu0 0
    %1141 = vmatpush1.bf16.msra.mxu0 0
    %1142 = vmatprep.subr.bf16.mxu0 0
    %1143 = vmatpush1.bf16.msra.mxu0 0
    %1144 = vmatprep.subr.bf16.mxu0 0
    %1145 = vmatpush1.bf16.msra.mxu0 0
    %1146 = vmatprep.subr.bf16.mxu0 0
    %1147 = vmatpush1.bf16.msra.mxu0 0
    %1148 = vmatprep.subr.bf16.mxu0 0
    %1149 = vmatpush1.bf16.msra.mxu0 0
    %1150 = vmatprep.subr.bf16.mxu0 0
    %1151 = vmatpush1.bf16.msra.mxu0 0
    %1152 = vmatprep.subr.bf16.mxu0 0
    %1153 = vmatpush1.bf16.msra.mxu0 0
    %1154 = vmatprep.subr.bf16.mxu0 0
    %1155 = vmatpush1.bf16.msra.mxu0 0
    %1156 = vmatprep.mubr.bf16.mxu0 0
    %1157 = vmatmul.mubr.bf16.gmra.mrb[0].mxu0 %v1036
    %v1158 = vpop.f32.mrb[0].mxu0
    %v1159 = vadd.f32 %v934, %v1158
    %v1160 = vpop.f32.mrb[0].mxu0
    %v1161 = vadd.f32 %v938, %v1160
    %v1162 = vpop.f32.mrb[0].mxu0
    %v1163 = vadd.f32 %v934, %v1162
    %v1164 = vpop.f32.mrb[0].mxu0
    %v1165 = vadd.f32 %v938, %v1164
    %1166 = vdwg.mxu0
    %1167 = vmatprep.subr.bf16.mxu0 %v1010
    %1168 = vmatpush1.bf16.msra.mxu0 %v1009
    %1169 = vmatprep.subr.bf16.mxu0 %v1018
    %1170 = vmatpush1.bf16.msra.mxu0 %v1017
    %1171 = vmatprep.subr.bf16.mxu0 0
    %1172 = vmatpush1.bf16.msra.mxu0 0
    %1173 = vmatprep.subr.bf16.mxu0 0
    %1174 = vmatpush1.bf16.msra.mxu0 0
    %1175 = vmatprep.subr.bf16.mxu0 0
    %1176 = vmatpush1.bf16.msra.mxu0 0
    %1177 = vmatprep.subr.bf16.mxu0 0
    %1178 = vmatpush1.bf16.msra.mxu0 0
    %1179 = vmatprep.subr.bf16.mxu0 0
    %1180 = vmatpush1.bf16.msra.mxu0 0
    %1181 = vmatprep.subr.bf16.mxu0 0
    %1182 = vmatpush1.bf16.msra.mxu0 0
    %1183 = vmatprep.subr.bf16.mxu0 0
    %1184 = vmatpush1.bf16.msra.mxu0 0
    %1185 = vmatprep.subr.bf16.mxu0 0
    %1186 = vmatpush1.bf16.msra.mxu0 0
    %1187 = vmatprep.subr.bf16.mxu0 0
    %1188 = vmatpush1.bf16.msra.mxu0 0
    %1189 = vmatprep.subr.bf16.mxu0 0
    %1190 = vmatpush1.bf16.msra.mxu0 0
    %1191 = vmatprep.subr.bf16.mxu0 0
    %1192 = vmatpush1.bf16.msra.mxu0 0
    %1193 = vmatprep.subr.bf16.mxu0 0
    %1194 = vmatpush1.bf16.msra.mxu0 0
    %1195 = vmatprep.subr.bf16.mxu0 0
    %1196 = vmatpush1.bf16.msra.mxu0 0
    %1197 = vmatprep.subr.bf16.mxu0 0
    %1198 = vmatpush1.bf16.msra.mxu0 0
    %1199 = vmatprep.mubr.bf16.mxu0 0
    %1200 = vmatmul.mubr.bf16.gmra.mrb[0].mxu0 %v1036
    %v1201 = vpop.f32.mrb[0].mxu0
    %v1202 = vadd.f32 %v942, %v1201
    %v1203 = vpop.f32.mrb[0].mxu0
    %v1204 = vadd.f32 %v946, %v1203
    %v1205 = vpop.f32.mrb[0].mxu0
    %v1206 = vadd.f32 %v942, %v1205
    %v1207 = vpop.f32.mrb[0].mxu0
    %v1208 = vadd.f32 %v946, %v1207
    %1209 = vdwg.mxu0
    %v1210 = vxor.u32 %v1073, 2147483648
    %v1211 = vxor.u32 %v1075, 2147483648
    %v1212 = vxor.u32 %v1116, 2147483648
    %v1213 = vxor.u32 %v1118, 2147483648
    %v1214 = vxor.u32 %v1159, 2147483648
    %v1215 = vxor.u32 %v1161, 2147483648
    %v1216 = vxor.u32 %v1202, 2147483648
    %v1217 = vxor.u32 %v1204, 2147483648
    %v1218 = vxor.u32 %v1077, 2147483648
    %v1219 = vxor.u32 %v1079, 2147483648
    %v1220 = vxor.u32 %v1120, 2147483648
    %v1221 = vxor.u32 %v1122, 2147483648
    %v1222 = vxor.u32 %v1163, 2147483648
    %v1223 = vxor.u32 %v1165, 2147483648
    %v1224 = vxor.u32 %v1206, 2147483648
    %v1225 = vxor.u32 %v1208, 2147483648
    %v1226 = vmul.f32 %v1210, 1.442695
    %v1227 = vpow.pop %v1226
    %v1228 = vmul.f32 %v1211, 1.442695
    %v1229 = vpow.pop %v1228
    %v1230 = vmul.f32 %v1212, 1.442695
    %v1231 = vpow.pop %v1230
    %v1232 = vmul.f32 %v1213, 1.442695
    %v1233 = vpow.pop %v1232
    %v1234 = vmul.f32 %v1214, 1.442695
    %v1235 = vpow.pop %v1234
    %v1236 = vmul.f32 %v1215, 1.442695
    %v1237 = vpow.pop %v1236
    %v1238 = vmul.f32 %v1216, 1.442695
    %v1239 = vpow.pop %v1238
    %v1240 = vmul.f32 %v1217, 1.442695
    %v1241 = vpow.pop %v1240
    %v1242 = vmul.f32 %v1218, 1.442695
    %v1243 = vpow.pop %v1242
    %v1244 = vmul.f32 %v1219, 1.442695
    %v1245 = vpow.pop %v1244
    %v1246 = vmul.f32 %v1220, 1.442695
    %v1247 = vpow.pop %v1246
    %v1248 = vmul.f32 %v1221, 1.442695
    %v1249 = vpow.pop %v1248
    %v1250 = vmul.f32 %v1222, 1.442695
    %v1251 = vpow.pop %v1250
    %v1252 = vmul.f32 %v1223, 1.442695
    %v1253 = vpow.pop %v1252
    %v1254 = vmul.f32 %v1224, 1.442695
    %v1255 = vpow.pop %v1254
    %v1256 = vmul.f32 %v1225, 1.442695
    %v1257 = vpow.pop %v1256
    %v1258 = vadd.f32 %v1227, 1.0
    %v1259 = vadd.f32 %v1229, 1.0
    %v1260 = vadd.f32 %v1231, 1.0
    %v1261 = vadd.f32 %v1233, 1.0
    %v1262 = vadd.f32 %v1235, 1.0
    %v1263 = vadd.f32 %v1237, 1.0
    %v1264 = vadd.f32 %v1239, 1.0
    %v1265 = vadd.f32 %v1241, 1.0
    %v1266 = vadd.f32 %v1243, 1.0
    %v1267 = vadd.f32 %v1245, 1.0
    %v1268 = vadd.f32 %v1247, 1.0
    %v1269 = vadd.f32 %v1249, 1.0
    %v1270 = vadd.f32 %v1251, 1.0
    %v1271 = vadd.f32 %v1253, 1.0
    %v1272 = vadd.f32 %v1255, 1.0
    %v1273 = vadd.f32 %v1257, 1.0
    %v1274 = vrcp.pop %v1258
    %v1275 = vmul.f32 1.0, %v1274
    %v1276 = vrcp.pop %v1259
    %v1277 = vmul.f32 1.0, %v1276
    %v1278 = vrcp.pop %v1260
    %v1279 = vmul.f32 1.0, %v1278
    %v1280 = vrcp.pop %v1261
    %v1281 = vmul.f32 1.0, %v1280
    %v1282 = vrcp.pop %v1262
    %v1283 = vmul.f32 1.0, %v1282
    %v1284 = vrcp.pop %v1263
    %v1285 = vmul.f32 1.0, %v1284
    %v1286 = vrcp.pop %v1264
    %v1287 = vmul.f32 1.0, %v1286
    %v1288 = vrcp.pop %v1265
    %v1289 = vmul.f32 1.0, %v1288
    %v1290 = vrcp.pop %v1266
    %v1291 = vmul.f32 1.0, %v1290
    %v1292 = vrcp.pop %v1267
    %v1293 = vmul.f32 1.0, %v1292
    %v1294 = vrcp.pop %v1268
    %v1295 = vmul.f32 1.0, %v1294
    %v1296 = vrcp.pop %v1269
    %v1297 = vmul.f32 1.0, %v1296
    %v1298 = vrcp.pop %v1270
    %v1299 = vmul.f32 1.0, %v1298
    %v1300 = vrcp.pop %v1271
    %v1301 = vmul.f32 1.0, %v1300
    %v1302 = vrcp.pop %v1272
    %v1303 = vmul.f32 1.0, %v1302
    %v1304 = vrcp.pop %v1273
    %v1305 = vmul.f32 1.0, %v1304
    %1306 = vst [vmem:[#allocation2] sm:$0xff] %v1275
    %1307 = vst [vmem:[#allocation2 + $0x8] sm:$0xff] %v1277
    %1308 = vst [vmem:[#allocation2 + $0x10] sm:$0xff] %v1279
    %1309 = vst [vmem:[#allocation2 + $0x18] sm:$0xff] %v1281
    %1310 = vst [vmem:[#allocation2 + $0x20] sm:$0xff] %v1283
    %1311 = vst [vmem:[#allocation2 + $0x28] sm:$0xff] %v1285
    %1312 = vst [vmem:[#allocation2 + $0x30] sm:$0xff] %v1287
    %1313 = vst [vmem:[#allocation2 + $0x38] sm:$0xff] %v1289
    %1314 = vst [vmem:[#allocation2 + $0x40] sm:$0xff] %v1291
    %1315 = vst [vmem:[#allocation2 + $0x48] sm:$0xff] %v1293
    %1316 = vst [vmem:[#allocation2 + $0x50] sm:$0xff] %v1295
    %1317 = vst [vmem:[#allocation2 + $0x58] sm:$0xff] %v1297
    %1318 = vst [vmem:[#allocation2 + $0x60] sm:$0xff] %v1299
    %1319 = vst [vmem:[#allocation2 + $0x68] sm:$0xff] %v1301
    %1320 = vst [vmem:[#allocation2 + $0x70] sm:$0xff] %v1303
    %1321 = vst [vmem:[#allocation2 + $0x78] sm:$0xff] %v1305
    // Predicated region
    $region38: #{tpu_custom_call.1} parent=1 // pred_check
      _
    $region39: #{tpu_custom_call.1} parent=1 // pred_check_branch
      %1323 = sbr.rel (0) target = $region41
    $region40: #{tpu_custom_call.1} parent=1 // pred_region
      %s1325 = ssub.s32 2048, 2048
      %1326 = vsyncadd [#allocation3], %s1325
      %s1327 = sshll.u32 [#allocation2], 4
      %s1328 = int_to_ptr.vmem [resolvable:$true] %s1327
      %1333 = dma.vmem_to_hbm [thread:$0]  %s1328, 2048, %s9, [#allocation3], 1024, 1024, 64
    $region41: #{tpu_custom_call.1} parent=1 // pred_fallthru
      _
    // Predicated region
    $region42: #{tpu_custom_call.1} parent=1 // pred_check
      _
    $region43: #{tpu_custom_call.1} parent=1 // pred_check_branch
      %1335 = sbr.rel (0) target = $region45
    $region44: #{tpu_custom_call.1} parent=1 // pred_region
      %1336 = dma.done [#allocation3], 2048
    $region45: #{tpu_custom_call.1} parent=1 // pred_fallthru
      _
    %1337 = vsyncpa [#allocation3], 1

</llo_original>
